<compile_context>
chip_gen: v7x
topology: tpu7x:2x2x1
jax: 0.10.0
libtpu: 0.0.40
codegen_flags: <defaults>
</compile_context>

<pallas_src>
import functools
import math

import jax
import jax.numpy as jnp
import numpy as np
from jax import lax
from jax.experimental import pallas as pl
from jax.experimental.pallas import tpu as pltpu

QUANTILES = (0.05, 0.25, 0.5, 0.75, 0.95)


def _cdiv(a, b):
    return (a + b - 1) // b


def _round_up(a, b):
    return _cdiv(a, b) * b


def _coverage_kernel(preds_ref, target_ref, out_ref, *, n_pairs, q_len,
                     tile_r, chunk, blocks_per_split, m):
    """One grid step over a (tile_r, 128) slab of the flattened M axis.

    preds_ref : (q_len, tile_r, 128) VMEM, quantile-major planes (all Q)
    target_ref: (tile_r, 128)        VMEM
    out_ref   : (n_pairs, 8, 128)    VMEM, resident across the inner axis
                                      (per-split partial coverage counts)
    """
    c = pl.program_id(0)
    s = pl.program_id(1)

    @pl.when(s == 0)
    def _init():
        out_ref[...] = jnp.zeros_like(out_ref)

    # Flat element offset of this tile (unclamped; redundant clamped steps get
    # a negative remainder below and contribute exactly zero).
    base_elem = (c * blocks_per_split + s) * (tile_r * 128)

    # Per-chunk flat offsets within a (chunk, 128) slab, hoisted out of the loop.
    rl = (lax.broadcasted_iota(jnp.int32, (chunk, 128), 0) * 128
          + lax.broadcasted_iota(jnp.int32, (chunk, 128), 1))

    @pl.loop(0, tile_r // chunk)
    def _per_chunk(i):
        row0 = pl.multiple_of(i * chunk, 8)
        # Validity mask: global flat index < m.  NaN-ing the target makes both
        # compares false for padded / out-of-bounds lanes, so padded HBM values
        # (and garbage in partial edge blocks) never contribute.
        rem = m - (base_elem + row0 * 128)
        t = target_ref[pl.ds(row0, chunk), :]
        t = jnp.where(rl < rem, t, jnp.asarray(jnp.nan, dtype=t.dtype))
        for p in range(n_pairs):
            lo = preds_ref[p, pl.ds(row0, chunk), :]
            hi = preds_ref[q_len - 1 - p, pl.ds(row0, chunk), :]
            covered = jnp.logical_and(lo <= t, t <= hi)
            # (chunk,128) -> (chunk//8, 8, 128) is (8,128)-tile aligned, so the
            # reshape is free and the sum lowers to plain vreg adds.
            part = jnp.sum(
                covered.astype(jnp.float32).reshape(chunk // 8, 8, 128), axis=0)
            out_ref[p] = out_ref[p] + part


def _chip_config(q_len, p_bytes, t_bytes):
    """Chip-gated (tile rows, vmem limit, num TC splits, is_v7)."""
    kind = ""
    try:
        kind = jax.devices()[0].device_kind.lower()
    except Exception:
        pass
    is_v7 = "v7" in kind
    try:
        vmem_cap = int(pltpu.get_tpu_info().vmem_capacity_bytes)
    except Exception:
        vmem_cap = (64 if is_v7 else 128) * 1024 * 1024
    # ~60% of physical VMEM for the double-buffered input stream; the rest is
    # headroom for the resident output block, iotas and Mosaic temporaries.
    budget = int(vmem_cap * 0.6)
    per_row = 2 * 128 * (q_len * p_bytes + t_bytes)   # double-buffered bytes/row
    rows = max(512, (budget // per_row) // 512 * 512)
    vmem_limit = int(min(vmem_cap - 8 * 1024 * 1024, budget + 12 * 1024 * 1024))
    n_split = 2 if is_v7 else 1
    return rows, vmem_limit, n_split, is_v7


def coverage_loss(preds, target, quantiles=QUANTILES, *, tile_rows=None,
                  num_splits=None):
    """preds: (..., Q) float, target: (...) float -> scalar float32 loss.

    tile_rows / num_splits: optional overrides (for tests); by default both are
    chosen per chip generation.
    """
    q_len = len(quantiles)
    assert preds.shape[-1] == q_len
    assert preds.shape[:-1] == target.shape
    n_pairs = q_len // 2
    assert n_pairs >= 1, "need at least one (i, j) pair with i < j"

    m = int(np.prod(target.shape)) if target.ndim else 1
    assert m >= 1
    p_bytes = jnp.dtype(preds.dtype).itemsize
    t_bytes = jnp.dtype(target.dtype).itemsize

    auto_rows, vmem_limit, auto_split, is_v7 = _chip_config(q_len, p_bytes, t_bytes)

    # Flatten; pad only the trailing <1024 ragged elements (values are ignored
    # by the in-kernel mask) BEFORE the transpose so pad+transpose fuse.
    m_pad = _round_up(m, 8 * 128)
    preds_2d = preds.reshape(m, q_len)
    target_1d = target.reshape(m)
    if m_pad != m:
        preds_2d = jnp.pad(preds_2d, ((0, m_pad - m), (0, 0)))
        target_1d = jnp.pad(target_1d, (0, m_pad - m))
    preds_qm = jnp.transpose(preds_2d)                 # (q_len, m_pad), pure transpose
    r_total = m_pad // 128                             # rows of 128 lanes (mult. of 8)
    preds_3d = preds_qm.reshape(q_len, r_total, 128)   # free (contiguous reshape)
    target_2d = target_1d.reshape(r_total, 128)        # free

    # Tile selection (rows of 128 lanes per grid step).
    if tile_rows is not None:
        tile_r = max(8, _round_up(min(int(tile_rows), _round_up(r_total, 8)), 8))
        chunk = math.gcd(tile_r, 512)                  # >= 8, divides tile_r
    elif r_total <= 512:
        tile_r = r_total
        chunk = r_total
    else:
        tile_r = min(auto_rows, _round_up(r_total, 512))
        chunk = 512

    blocks_total = _cdiv(r_total, tile_r)
    n_split = auto_split if num_splits is None else max(1, int(num_splits))
    n_split = min(n_split, blocks_total)
    blocks_per_split = _cdiv(blocks_total, n_split)
    last_block = blocks_total - 1

    def _block_idx(c, s):
        # Clamp so redundant trailing steps re-read a valid block (their
        # contribution is zeroed by the in-kernel mask).
        return jnp.minimum(c * blocks_per_split + s, last_block)

    kernel = functools.partial(
        _coverage_kernel, n_pairs=n_pairs, q_len=q_len, tile_r=tile_r,
        chunk=chunk, blocks_per_split=blocks_per_split, m=m)

    cost = pl.CostEstimate(
        flops=int(5 * n_pairs * m_pad),
        transcendentals=0,
        bytes_accessed=int(q_len * m_pad * p_bytes + m_pad * t_bytes
                           + n_split * n_pairs * 8 * 128 * 4),
    )

    def _call(semantics):
        return pl.pallas_call(
            kernel,
            out_shape=jax.ShapeDtypeStruct((n_split * n_pairs, 8, 128),
                                           jnp.float32),
            grid_spec=pltpu.PrefetchScalarGridSpec(
                num_scalar_prefetch=0,
                grid=(n_split, blocks_per_split),
                in_specs=[
                    pl.BlockSpec((q_len, tile_r, 128),
                                 lambda c, s: (0, _block_idx(c, s), 0)),
                    pl.BlockSpec((tile_r, 128),
                                 lambda c, s: (_block_idx(c, s), 0)),
                ],
                out_specs=pl.BlockSpec((n_pairs, 8, 128),
                                       lambda c, s: (c, 0, 0)),
            ),
            compiler_params=pltpu.CompilerParams(
                dimension_semantics=semantics,
                vmem_limit_bytes=vmem_limit,
            ),
            cost_estimate=cost,
        )(preds_3d, target_2d)

    if n_split > 1 and is_v7:
        # Only CORE_PARALLEL reliably shards the leading axis across the two
        # v7x TensorCores; fall back to plain "parallel" if unavailable.
        try:
            counts = _call((getattr(pltpu, "CORE_PARALLEL"),
                            getattr(pltpu, "ARBITRARY")))
        except Exception:
            counts = _call(("parallel", "arbitrary"))
    elif n_split > 1:
        counts = _call(("parallel", "arbitrary"))
    else:
        counts = _call(("arbitrary", "arbitrary"))

    # Tiny combine + square + mean in JAX.  (Counts are exact in f32 per lane;
    # the final f32 sum can lose integer exactness only for >16.7M covered
    # elements per lane group -- relative error ~1e-7, fine for a loss.)
    pair_counts = jnp.sum(counts.reshape(n_split, n_pairs, 8, 128),
                          axis=(0, 2, 3))                       # (n_pairs,)
    frac = pair_counts / jnp.float32(m)
    widths = jnp.asarray(
        [float(quantiles[q_len - 1 - p]) - float(quantiles[p])
         for p in range(n_pairs)], dtype=jnp.float32)
    return jnp.mean((frac - widths) ** 2)


def coverage_loss_ref(preds, target, quantiles=QUANTILES):
    """Pure-JAX reference mirroring the PyTorch module (prints omitted)."""
    q_len = len(quantiles)
    losses = []
    i, j = 0, q_len - 1
    while i < j:
        left, right = quantiles[i], quantiles[j]
        covered = jnp.logical_and(preds[..., i] <= target, target <= preds[..., j])
        losses.append((jnp.mean(covered.astype(jnp.float32))
                       - jnp.float32(right - left)) ** 2)
        i += 1
        j -= 1
    return jnp.mean(jnp.stack(losses))


if __name__ == "__main__":
    key = jax.random.PRNGKey(0)
    k1, k2, k3, k4, k5, k6 = jax.random.split(key, 6)
    Q = len(QUANTILES)

    # Small shapes consistent with the forward: preds (B, T, Q), target (B, T).
    B, T = 8, 32                                   # m=256, tail-masked path
    preds = jnp.sort(jax.random.normal(k1, (B, T, Q), dtype=jnp.float32), axis=-1)
    target = jax.random.normal(k2, (B, T), dtype=jnp.float32)
    loss = jax.block_until_ready(coverage_loss(preds, target, QUANTILES))
    ref = jax.block_until_ready(coverage_loss_ref(preds, target, QUANTILES))
    np.testing.assert_allclose(np.asarray(loss), np.asarray(ref),
                               rtol=1e-5, atol=1e-6)

    # Multi-step accumulation + 2-way split + partial/clamped edge blocks.
    B2, T2 = 4, 1280                               # m=5120, R=40 rows
    preds2 = jnp.sort(jax.random.normal(k3, (B2, T2, Q), dtype=jnp.float32), axis=-1)
    target2 = jax.random.normal(k4, (B2, T2), dtype=jnp.float32)
    loss2 = jax.block_until_ready(coverage_loss(preds2, target2, QUANTILES,
                                                tile_rows=16, num_splits=2))
    ref2 = jax.block_until_ready(coverage_loss_ref(preds2, target2, QUANTILES))
    np.testing.assert_allclose(np.asarray(loss2), np.asarray(ref2),
                               rtol=1e-5, atol=1e-6)

    # Unaligned M (not a multiple of 128) with tiny tiles: in-kernel lane mask.
    B3, T3 = 4, 1000                               # m=4000
    preds3 = jnp.sort(jax.random.normal(k5, (B3, T3, Q), dtype=jnp.float32), axis=-1)
    target3 = jax.random.normal(k6, (B3, T3), dtype=jnp.float32)
    loss3 = jax.block_until_ready(coverage_loss(preds3, target3, QUANTILES,
                                                tile_rows=8))
    ref3 = jax.block_until_ready(coverage_loss_ref(preds3, target3, QUANTILES))
    np.testing.assert_allclose(np.asarray(loss3), np.asarray(ref3),
                               rtol=1e-5, atol=1e-6)

    # bf16 inputs exercise the reduced-HBM-traffic path (counts stay in f32).
    loss4 = jax.block_until_ready(
        coverage_loss(preds.astype(jnp.bfloat16), target.astype(jnp.bfloat16),
                      QUANTILES))
    ref4 = jax.block_until_ready(
        coverage_loss_ref(preds.astype(jnp.bfloat16), target.astype(jnp.bfloat16),
                          QUANTILES))
    np.testing.assert_allclose(np.asarray(loss4), np.asarray(ref4),
                               rtol=1e-5, atol=1e-6)

    print("KERNEL_OK")
</pallas_src>

<mosaic_0001>
module attributes {stable_mosaic.version = 11 : i64} {
  func.func @_coverage_kernel(%arg0: i32, %arg1: i32, %arg2: memref<5x8x128xf32, #tpu.memory_space<vmem>>, %arg3: memref<8x128xf32, #tpu.memory_space<vmem>>, %arg4: memref<2x8x128xf32, #tpu.memory_space<vmem>>) attributes {dimension_semantics = [#tpu.dimension_semantics<arbitrary>, #tpu.dimension_semantics<arbitrary>], iteration_bounds = array<i64: 1, 1>, scalar_prefetch = 0 : i64, scratch_operands = 0 : i64, tpu.core_type = #tpu.core_type<tc>, window_params = [{transform_indices = @transform_0, window_bounds = array<i64: 5, 8, 128>}, {transform_indices = @transform_1, window_bounds = array<i64: 8, 128>}, {transform_indices = @transform_2, window_bounds = array<i64: 2, 8, 128>}]} {
    %c0_i32 = arith.constant 0 : i32
    %0 = arith.cmpi eq, %arg1, %c0_i32 : i32
    %1 = arith.extui %0 : i1 to i32
    %c0_i32_0 = arith.constant 0 : i32
    %2 = arith.cmpi ne, %1, %c0_i32_0 : i32
    scf.if %2 {
      %cst_25 = arith.constant 0.000000e+00 : f32
      %62 = vector.broadcast %cst_25 : f32 to vector<2x8x128xf32>
      %c0_26 = arith.constant 0 : index
      %c0_27 = arith.constant 0 : index
      %c0_28 = arith.constant 0 : index
      %63 = vector.load %arg4[%c0_26, %c0_27, %c0_28] : memref<2x8x128xf32, #tpu.memory_space<vmem>>, vector<2x8x128xf32>
      tpu.vector_store %arg4[%c0_26, %c0_27, %c0_28], %62 {strides = array<i32>} : memref<2x8x128xf32, #tpu.memory_space<vmem>>, vector<2x8x128xf32>,
    } else {
    }
    %c1_i32 = arith.constant 1 : i32
    %3 = arith.muli %arg0, %c1_i32 : i32
    %4 = arith.addi %3, %arg1 : i32
    %c1024_i32 = arith.constant 1024 : i32
    %5 = arith.muli %4, %c1024_i32 : i32
    %6 = tpu.iota {dimensions = array<i32: 0>} : vector<8x128xi32>
    %c128_i32 = arith.constant 128 : i32
    %7 = vector.broadcast %c128_i32 : i32 to vector<8x128xi32>
    %8 = arith.muli %6, %7 : vector<8x128xi32>
    %9 = tpu.iota {dimensions = array<i32: 1>} : vector<8x128xi32>
    %10 = arith.addi %8, %9 : vector<8x128xi32>
    %c0_i32_1 = arith.constant 0 : i32
    %c1_i32_2 = arith.constant 1 : i32
    %11 = arith.muli %c0_i32_1, %c1_i32_2 : i32
    %c0_i32_3 = arith.constant 0 : i32
    %12 = arith.addi %c0_i32_3, %11 : i32
    %c8_i32 = arith.constant 8 : i32
    %13 = arith.muli %12, %c8_i32 : i32
    %14 = tpu.assume_multiple %13, 8 : i32
    %c128_i32_4 = arith.constant 128 : i32
    %15 = arith.muli %14, %c128_i32_4 : i32
    %16 = arith.addi %5, %15 : i32
    %c256_i32 = arith.constant 256 : i32
    %17 = arith.subi %c256_i32, %16 : i32
    %18 = arith.index_cast %14 : i32 to index
    %c0 = arith.constant 0 : index
    %19 = vector.load %arg3[%18, %c0] : memref<8x128xf32, #tpu.memory_space<vmem>>, vector<8x128xf32>
    %20 = vector.broadcast %17 : i32 to vector<8x128xi32>
    %21 = arith.cmpi slt, %10, %20 : vector<8x128xi32>
    %cst = arith.constant 0x7FC00000 : f32
    %22 = vector.broadcast %cst : f32 to vector<8x128xf32>
    %23 = arith.select %21, %19, %22 : vector<8x128xi1>, vector<8x128xf32>
    %c0_5 = arith.constant 0 : index
    %24 = arith.index_cast %14 : i32 to index
    %c0_6 = arith.constant 0 : index
    %25 = vector.load %arg2[%c0_5, %24, %c0_6] : memref<5x8x128xf32, #tpu.memory_space<vmem>>, vector<1x8x128xf32>
    %26 = vector.shape_cast %25 : vector<1x8x128xf32> to vector<8x128xf32>
    %c4 = arith.constant 4 : index
    %27 = arith.index_cast %14 : i32 to index
    %c0_7 = arith.constant 0 : index
    %28 = vector.load %arg2[%c4, %27, %c0_7] : memref<5x8x128xf32, #tpu.memory_space<vmem>>, vector<1x8x128xf32>
    %29 = vector.shape_cast %28 : vector<1x8x128xf32> to vector<8x128xf32>
    %30 = arith.cmpf ole, %26, %23 : vector<8x128xf32>
    %31 = arith.cmpf ole, %23, %29 : vector<8x128xf32>
    %32 = arith.andi %30, %31 : vector<8x128xi1>
    %33 = arith.extui %32 : vector<8x128xi1> to vector<8x128xi32>
    %34 = arith.sitofp %33 : vector<8x128xi32> to vector<8x128xf32>
    %35 = vector.shape_cast %34 : vector<8x128xf32> to vector<1x8x128xf32>
    %cst_8 = arith.constant dense<0.000000e+00> : vector<8x128xf32>
    %36 = vector.multi_reduction <add>, %35, %cst_8 [0] : vector<1x8x128xf32> to vector<8x128xf32>
    %c0_9 = arith.constant 0 : index
    %c0_10 = arith.constant 0 : index
    %c0_11 = arith.constant 0 : index
    %37 = vector.load %arg4[%c0_9, %c0_10, %c0_11] : memref<2x8x128xf32, #tpu.memory_space<vmem>>, vector<1x8x128xf32>
    %38 = vector.shape_cast %37 : vector<1x8x128xf32> to vector<8x128xf32>
    %39 = arith.addf %38, %36 : vector<8x128xf32>
    %c0_12 = arith.constant 0 : index
    %c0_13 = arith.constant 0 : index
    %c0_14 = arith.constant 0 : index
    %40 = vector.load %arg4[%c0_12, %c0_13, %c0_14] : memref<2x8x128xf32, #tpu.memory_space<vmem>>, vector<1x8x128xf32>
    %41 = vector.shape_cast %40 : vector<1x8x128xf32> to vector<8x128xf32>
    %42 = vector.shape_cast %39 : vector<8x128xf32> to vector<1x8x128xf32>
    tpu.vector_store %arg4[%c0_12, %c0_13, %c0_14], %42 {strides = array<i32>} : memref<2x8x128xf32, #tpu.memory_space<vmem>>, vector<1x8x128xf32>,
    %c1 = arith.constant 1 : index
    %43 = arith.index_cast %14 : i32 to index
    %c0_15 = arith.constant 0 : index
    %44 = vector.load %arg2[%c1, %43, %c0_15] : memref<5x8x128xf32, #tpu.memory_space<vmem>>, vector<1x8x128xf32>
    %45 = vector.shape_cast %44 : vector<1x8x128xf32> to vector<8x128xf32>
    %c3 = arith.constant 3 : index
    %46 = arith.index_cast %14 : i32 to index
    %c0_16 = arith.constant 0 : index
    %47 = vector.load %arg2[%c3, %46, %c0_16] : memref<5x8x128xf32, #tpu.memory_space<vmem>>, vector<1x8x128xf32>
    %48 = vector.shape_cast %47 : vector<1x8x128xf32> to vector<8x128xf32>
    %49 = arith.cmpf ole, %45, %23 : vector<8x128xf32>
    %50 = arith.cmpf ole, %23, %48 : vector<8x128xf32>
    %51 = arith.andi %49, %50 : vector<8x128xi1>
    %52 = arith.extui %51 : vector<8x128xi1> to vector<8x128xi32>
    %53 = arith.sitofp %52 : vector<8x128xi32> to vector<8x128xf32>
    %54 = vector.shape_cast %53 : vector<8x128xf32> to vector<1x8x128xf32>
    %cst_17 = arith.constant dense<0.000000e+00> : vector<8x128xf32>
    %55 = vector.multi_reduction <add>, %54, %cst_17 [0] : vector<1x8x128xf32> to vector<8x128xf32>
    %c1_18 = arith.constant 1 : index
    %c0_19 = arith.constant 0 : index
    %c0_20 = arith.constant 0 : index
    %56 = vector.load %arg4[%c1_18, %c0_19, %c0_20] : memref<2x8x128xf32, #tpu.memory_space<vmem>>, vector<1x8x128xf32>
    %57 = vector.shape_cast %56 : vector<1x8x128xf32> to vector<8x128xf32>
    %58 = arith.addf %57, %55 : vector<8x128xf32>
    %c1_21 = arith.constant 1 : index
    %c0_22 = arith.constant 0 : index
    %c0_23 = arith.constant 0 : index
    %59 = vector.load %arg4[%c1_21, %c0_22, %c0_23] : memref<2x8x128xf32, #tpu.memory_space<vmem>>, vector<1x8x128xf32>
    %60 = vector.shape_cast %59 : vector<1x8x128xf32> to vector<8x128xf32>
    %61 = vector.shape_cast %58 : vector<8x128xf32> to vector<1x8x128xf32>
    tpu.vector_store %arg4[%c1_21, %c0_22, %c0_23], %61 {strides = array<i32>} : memref<2x8x128xf32, #tpu.memory_space<vmem>>, vector<1x8x128xf32>,
    %c1_i32_24 = arith.constant 1 : i32
    return
  }
  func.func @transform_0(%arg0: i32, %arg1: i32) -> (i32, i32, i32) {
    %c1_i32 = arith.constant 1 : i32
    %0 = arith.muli %arg0, %c1_i32 : i32
    %1 = arith.addi %0, %arg1 : i32
    %c0_i32 = arith.constant 0 : i32
    %2 = arith.minsi %1, %c0_i32 : i32
    %c0_i32_0 = arith.constant 0 : i32
    %c0_i32_1 = arith.constant 0 : i32
    %c0_i32_2 = arith.constant 0 : i32
    return %c0_i32_0, %2, %c0_i32_1 : i32, i32, i32
  }
  func.func @transform_1(%arg0: i32, %arg1: i32) -> (i32, i32) {
    %c1_i32 = arith.constant 1 : i32
    %0 = arith.muli %arg0, %c1_i32 : i32
    %1 = arith.addi %0, %arg1 : i32
    %c0_i32 = arith.constant 0 : i32
    %2 = arith.minsi %1, %c0_i32 : i32
    %c0_i32_0 = arith.constant 0 : i32
    %c0_i32_1 = arith.constant 0 : i32
    return %2, %c0_i32_0 : i32, i32
  }
  func.func @transform_2(%arg0: i32, %arg1: i32) -> (i32, i32, i32) {
    %c0_i32 = arith.constant 0 : i32
    %c0_i32_0 = arith.constant 0 : i32
    %c0_i32_1 = arith.constant 0 : i32
    return %arg0, %c0_i32, %c0_i32_0 : i32, i32, i32
  }
}

</mosaic_0001>

<llo_original>
// kernel: tpu_custom_call.1
$region0: #{tpu_custom_call.1}
  #allocation0 [shape = 'u32[]', space=smem, size = 0x4, offset = 0x4, fixed_abs, tag = 'smem constant byte address 0x4 - core index']
  #allocation1 [shape = 'u32[144,128]{1,0:T(1,128)}', space=vmem, size = 0x12000, scoped, tag = 'internal scratch']
  %s0 = inlined_call_operand.hbm [shape: f32[5,8,128], index: 0, kind: input, shape index: {}]
  %s1 = inlined_call_operand.hbm [shape: f32[8,128], index: 1, kind: input, shape index: {}]
  %s2 = inlined_call_operand.hbm [shape: f32[2,8,128], index: 2, kind: output, shape index: {}]
  %s3 = sld [smem:[#allocation0]]
  $region30: #{tpu_custom_call.1} parent=0
    _
  %s5 = ssub.s32 1, %s3
  %s6 = scalar_select 0, %s5, %s3
  $region1: #{tpu_custom_call.1} parent=0
    #allocation2 [shape = 'u8[20480]{0}', space=vmem, size = 0x5000, scoped, tag = 'input window, operand 0, single buffered']
    #allocation3 [shape = 's32[1]{0}', space=sflag, size = 0x4, scoped, tag = 'scoped memory for tpu_custom_call.1']
    #allocation4 [shape = 's32[1]{0}', space=sflag, size = 0x4, scoped, tag = 'scoped memory for tpu_custom_call.1']
    #allocation5 [shape = 'u8[4096]{0}', space=vmem, size = 0x1000, scoped, tag = 'input window, operand 1, single buffered']
    #allocation6 [shape = 's32[1]{0}', space=sflag, size = 0x4, scoped, tag = 'scoped memory for tpu_custom_call.1']
    #allocation7 [shape = 'u8[8192]{0}', space=vmem, size = 0x2000, scoped, tag = 'output window, operand 0, single buffered']
    %7 = vsyncpa [#allocation3], 0
    %8 = vsyncpa [#allocation6], 0
    %9 = vsyncpa [#allocation4], 0
    // Predicated region
    $region2: #{tpu_custom_call.1} parent=1 // pred_check
      _
    $region3: #{tpu_custom_call.1} parent=1 // pred_check_branch
      %11 = sbr.rel (0) target = $region5
    $region4: #{tpu_custom_call.1} parent=1 // pred_region
      %s12 = sadd.s32 0, 0
      %p13 = scmp.lt.s32.totalorder %s12, 0
      %s14 = scalar_select %p13, %s12, 0
      %s16 = ssub.s32 640, 640
      %17 = vsyncadd [#allocation3], %s16
      %s18 = smul.addr %s14, 128
      %s19 = scalar_lea.hbm %s0, %s18
      %s20 = sshll.u32 [#allocation2], 4
      %s21 = int_to_ptr.vmem [resolvable:$true] %s20
      %26 = dma.hbm_to_vmem [thread:$0]  %s19, 640, %s21, [#allocation3], 128, 128, 8
    $region5: #{tpu_custom_call.1} parent=1 // pred_fallthru
      _
    // Predicated region
    $region6: #{tpu_custom_call.1} parent=1 // pred_check
      _
    $region7: #{tpu_custom_call.1} parent=1 // pred_check_branch
      %28 = sbr.rel (0) target = $region9
    $region8: #{tpu_custom_call.1} parent=1 // pred_region
      %s29 = sadd.s32 0, 0
      %p30 = scmp.lt.s32.totalorder %s29, 0
      %s31 = scalar_select %p30, %s29, 0
      %s33 = ssub.s32 128, 128
      %34 = vsyncadd [#allocation6], %s33
      %s35 = smul.addr %s31, 128
      %s36 = scalar_lea.hbm %s1, %s35
      %s38 = sshll.u32 [#allocation5], 4
      %s39 = int_to_ptr.vmem [resolvable:$true] %s38
      %41 = dma.hbm_to_vmem [thread:$0]  %s36, 128, %s39, [#allocation6]
    $region9: #{tpu_custom_call.1} parent=1 // pred_fallthru
      _
    // Predicated region
    $region10: #{tpu_custom_call.1} parent=1 // pred_check
      _
    $region11: #{tpu_custom_call.1} parent=1 // pred_check_branch
      %43 = sbr.rel (0) target = $region13
    $region12: #{tpu_custom_call.1} parent=1 // pred_region
      %44 = dma.done [#allocation3], 640
    $region13: #{tpu_custom_call.1} parent=1 // pred_fallthru
      _
    // Predicated region
    $region14: #{tpu_custom_call.1} parent=1 // pred_check
      _
    $region15: #{tpu_custom_call.1} parent=1 // pred_check_branch
      %46 = sbr.rel (0) target = $region17
    $region16: #{tpu_custom_call.1} parent=1 // pred_region
      %47 = dma.done [#allocation6], 128
    $region17: #{tpu_custom_call.1} parent=1 // pred_fallthru
      _
    %s48 = sadd.s32 0, 0
    %p49 = scmp.lt.s32.totalorder %s48, 0
    %s50 = scalar_select %p49, %s48, 0
    %s51 = sadd.s32 0, 0
    %p52 = scmp.lt.s32.totalorder %s51, 0
    %s53 = scalar_select %p52, %s51, 0
    %p54 = scmp.eq.s32.totalorder 0, 0
    // Predicated region
    $region18: #{tpu_custom_call.1} parent=1 // pred_check
      %p55 = pneg %p54
    $region19: #{tpu_custom_call.1} parent=1 // pred_check_branch
      %57 = sbr.rel (%p55) target = $region21
    $region20: #{tpu_custom_call.1} parent=1 // pred_region
      %58 = vst [vmem:[#allocation7] sm:$0xff] 0.0
      %59 = vst [vmem:[#allocation7 + $0x8] sm:$0xff] 0.0
    $region21: #{tpu_custom_call.1} parent=1 // pred_fallthru
      _
    %s60 = sadd.s32 0, 0
    %s61 = smul.u32 %s60, 1024
    %v62 = vlaneseq
    %v63 = vshrl.u32 %v62, 7
    %v64 = vmul.u32 %v63, 128
    %v65 = vlaneseq
    %v66 = vand.u32 %v65, 127
    %v67 = vadd.s32 %v64, %v66
    %s68 = smul.u32 0, 128
    %s69 = sadd.s32 %s61, %s68
    %s70 = ssub.s32 256, %s69
    %v71 = vld [vmem:[#allocation5] sm:$0xff]
    %v72 = vstv %s70
    %vm73 = vcmp.lt.s32.totalorder %v67, %v72
    %v74 = vsel %vm73, %v71, nan
    %v75 = vld [vmem:[#allocation2] sm:$0xff]
    %s76 = sadd.s32 0, 32
    %s77 = scalar_lea.vmem [#allocation2], %s76
    %v78 = vld [vmem:[%s77] sm:$0xff]
    %vm79 = vcmp.le.f32.partialorder %v75, %v74
    %vm80 = vcmp.le.f32.partialorder %v74, %v78
    %vm81 = vmand %vm79, %vm80
    %v82 = vsel %vm81, 1, 0
    %v83 = vcvt.s32.f32 %v82
    %v84 = vadd.f32 %v83, 0.0
    %v85 = vld [vmem:[#allocation7] sm:$0xff]
    %v86 = vadd.f32 %v85, %v84
    %87 = vst [vmem:[#allocation7] sm:$0xff] %v86
    %s88 = sadd.s32 0, 8
    %s89 = scalar_lea.vmem [#allocation2], %s88
    %v90 = vld [vmem:[%s89] sm:$0xff]
    %s91 = sadd.s32 0, 24
    %s92 = scalar_lea.vmem [#allocation2], %s91
    %v93 = vld [vmem:[%s92] sm:$0xff]
    %vm94 = vcmp.le.f32.partialorder %v90, %v74
    %vm95 = vcmp.le.f32.partialorder %v74, %v93
    %vm96 = vmand %vm94, %vm95
    %v97 = vsel %vm96, 1, 0
    %v98 = vcvt.s32.f32 %v97
    %v99 = vadd.f32 %v98, 0.0
    %s100 = scalar_lea.vmem [#allocation7], 8
    %v101 = vld [vmem:[%s100] sm:$0xff]
    %v102 = vadd.f32 %v101, %v99
    %103 = vst [vmem:[%s100] sm:$0xff] %v102
    // Predicated region
    $region22: #{tpu_custom_call.1} parent=1 // pred_check
      _
    $region23: #{tpu_custom_call.1} parent=1 // pred_check_branch
      %105 = sbr.rel (0) target = $region25
    $region24: #{tpu_custom_call.1} parent=1 // pred_region
      %s107 = ssub.s32 256, 256
      %108 = vsyncadd [#allocation4], %s107
      %s109 = sshll.u32 [#allocation7], 4
      %s110 = int_to_ptr.vmem [resolvable:$true] %s109
      %115 = dma.vmem_to_hbm [thread:$0]  %s110, 256, %s2, [#allocation4], 128, 128, 8
    $region25: #{tpu_custom_call.1} parent=1 // pred_fallthru
      _
    // Predicated region
    $region26: #{tpu_custom_call.1} parent=1 // pred_check
      _
    $region27: #{tpu_custom_call.1} parent=1 // pred_check_branch
      %117 = sbr.rel (0) target = $region29
    $region28: #{tpu_custom_call.1} parent=1 // pred_region
      %118 = dma.done [#allocation4], 256
    $region29: #{tpu_custom_call.1} parent=1 // pred_fallthru
      _
    %119 = vsyncpa [#allocation3], 1
    %120 = vsyncpa [#allocation6], 1
    %121 = vsyncpa [#allocation4], 1

</llo_original>
